<compile_context>
chip_gen: v6e
topology: v6e:2x2x1
jax: 0.10.0
libtpu: 0.0.40
codegen_flags: <defaults>
</compile_context>

<pallas_src>
import jax
import jax.numpy as jnp
from jax.experimental import pallas as pl
from jax.experimental.pallas import tpu as pltpu


def _round_up(n, m):
    return ((n + m - 1) // m) * m


def vanilla_rnn_kernel(x_ref, w_hx_ref, w_hh_ref, w_ph_ref, b_h_ref, b_p_ref,
                       p_ref):
    """Full RNN recurrence + output projection for one batch tile.

    x_ref:    (T, TB)   f32   time-major input (input_dim == 1)
    w_hx_ref: (1, HP)   f32
    w_hh_ref: (HP, HP)  f32
    w_ph_ref: (HP, CP)  f32
    b_h_ref:  (1, HP)   f32
    b_p_ref:  (1, CP)   f32
    p_ref:    (TB, CP)  f32   padded logits
    """
    T, TB = x_ref.shape
    HP = w_hh_ref.shape[0]

    w_hh = w_hh_ref[...]                                        # (HP, HP)

    # Hoisted input + bias term for all timesteps at once.  Exact for
    # input_dim == 1: (TB, 1) @ (1, HP) is just an outer-product broadcast,
    # so do it on the VPU in one shot instead of T degenerate K=1 matmuls.
    x_all = x_ref[...]                                          # (T, TB)
    inp_all = (x_all[:, :, None] * w_hx_ref[...][None, :, :]
               + b_h_ref[...][None, :, :])                      # (T, TB, HP)

    # Fully-unrolled serial recurrence (static indices only).  h_0 == 0, so
    # the first recurrent matmul vanishes.
    if T >= 1:
        h = jnp.tanh(inp_all[0])                                # (TB, HP)
    else:
        h = jnp.zeros((TB, HP), dtype=jnp.float32)
    for i in range(1, T):
        rec = jnp.dot(h, w_hh, preferred_element_type=jnp.float32)
        h = jnp.tanh(inp_all[i] + rec)

    p_ref[...] = (jnp.dot(h, w_ph_ref[...],
                          preferred_element_type=jnp.float32)
                  + b_p_ref[...])


def vanilla_rnn_forward(x, w_hx, w_hh, w_ph, b_h, b_p):
    """x: (B, T) f32 scalar features (input_dim == 1).  Returns (B, C) logits."""
    B, T = x.shape
    H = w_hh.shape[0]
    C = w_ph.shape[1]

    # Lane-dense padding (exact, see header notes).
    HP = _round_up(H, 128)
    CP = _round_up(C, 128)
    if B > 128:
        TB = 128
        BP = _round_up(B, TB)
    else:
        BP = _round_up(B, 8)
        TB = BP

    f32 = jnp.float32
    x_tb = jnp.pad(x.astype(f32).T, ((0, 0), (0, BP - B)))          # (T, BP)
    w_hx_p = jnp.pad(w_hx.astype(f32), ((0, 0), (0, HP - H)))       # (1, HP)
    w_hh_p = jnp.pad(w_hh.astype(f32), ((0, HP - H), (0, HP - H)))  # (HP, HP)
    w_ph_p = jnp.pad(w_ph.astype(f32), ((0, HP - H), (0, CP - C)))  # (HP, CP)
    b_h_p = jnp.pad(b_h.astype(f32).reshape(1, H), ((0, 0), (0, HP - H)))
    b_p_p = jnp.pad(b_p.astype(f32).reshape(1, C), ((0, 0), (0, CP - C)))

    grid = (BP // TB,)

    p_pad = pl.pallas_call(
        vanilla_rnn_kernel,
        out_shape=jax.ShapeDtypeStruct((BP, CP), f32),
        grid_spec=pltpu.PrefetchScalarGridSpec(
            num_scalar_prefetch=0,
            grid=grid,
            in_specs=[
                pl.BlockSpec((T, TB), lambda b: (0, b)),
                pl.BlockSpec((1, HP), lambda b: (0, 0)),
                pl.BlockSpec((HP, HP), lambda b: (0, 0)),
                pl.BlockSpec((HP, CP), lambda b: (0, 0)),
                pl.BlockSpec((1, HP), lambda b: (0, 0)),
                pl.BlockSpec((1, CP), lambda b: (0, 0)),
            ],
            out_specs=pl.BlockSpec((TB, CP), lambda b: (b, 0)),
        ),
        compiler_params=pltpu.CompilerParams(
            # Batch tiles are independent -> shard across TensorCores (v7x);
            # neutral on v5e/v6e (single TC).
            dimension_semantics=("parallel",)),
    )(x_tb, w_hx_p, w_hh_p, w_ph_p, b_h_p, b_p_p)

    return p_pad[:B, :C]


def reference_forward(x, w_hx, w_hh, w_ph, b_h, b_p):
    """Pure-JAX reference mirroring the PyTorch forward."""
    B, T = x.shape
    H = w_hh.shape[0]
    h_t = jnp.zeros((B, H), dtype=jnp.float32)
    for i in range(T):
        h_t = jnp.tanh(x[:, i:i + 1] @ w_hx + h_t @ w_hh + b_h)
    return h_t @ w_ph + b_p


if __name__ == "__main__":
    # Small shapes consistent with the module (input_dim = 1).
    batch_size = 2
    seq_length = 8
    input_dim = 1
    num_hidden = 32
    num_classes = 10
    sigma = 0.001

    key = jax.random.PRNGKey(0)
    k_x, k_hx, k_ph, k_hh = jax.random.split(key, 4)

    W_hx = sigma * jax.random.normal(k_hx, (input_dim, num_hidden), jnp.float32)
    W_ph = sigma * jax.random.normal(k_ph, (num_hidden, num_classes), jnp.float32)
    W_hh = sigma * jax.random.normal(k_hh, (num_hidden, num_hidden), jnp.float32)
    b_p = jnp.zeros((num_classes,), jnp.float32)
    b_h = jnp.zeros((num_hidden,), jnp.float32)

    # Input: (batch, seq_length) of scalar features (e.g. palindrome digits).
    x = jax.random.normal(k_x, (batch_size, seq_length), jnp.float32)

    p = vanilla_rnn_forward(x, W_hx, W_hh, W_ph, b_h, b_p)
    p = jax.block_until_ready(p)

    p_ref = reference_forward(x, W_hx, W_hh, W_ph, b_h, b_p)
    assert p.shape == (batch_size, num_classes)
    assert jnp.allclose(p, p_ref, atol=1e-6, rtol=1e-5), "mismatch vs reference"

    print("KERNEL_OK")
</pallas_src>

<mosaic_0001>
module attributes {stable_mosaic.version = 11 : i64} {
  func.func @vanilla_rnn_kernel(%arg0: i32, %arg1: memref<8x8xf32, #tpu.memory_space<vmem>>, %arg2: memref<1x128xf32, #tpu.memory_space<vmem>>, %arg3: memref<128x128xf32, #tpu.memory_space<vmem>>, %arg4: memref<128x128xf32, #tpu.memory_space<vmem>>, %arg5: memref<1x128xf32, #tpu.memory_space<vmem>>, %arg6: memref<1x128xf32, #tpu.memory_space<vmem>>, %arg7: memref<8x128xf32, #tpu.memory_space<vmem>>) attributes {dimension_semantics = [#tpu.dimension_semantics<parallel>], iteration_bounds = array<i64: 1>, scalar_prefetch = 0 : i64, scratch_operands = 0 : i64, tpu.core_type = #tpu.core_type<tc>, window_params = [{transform_indices = @transform_0, window_bounds = array<i64: 8, 8>}, {pipeline_mode = #tpu.pipeline_mode<synchronous>, transform_indices = @transform_1, window_bounds = array<i64: 1, 128>}, {pipeline_mode = #tpu.pipeline_mode<synchronous>, transform_indices = @transform_2, window_bounds = array<i64: 128, 128>}, {pipeline_mode = #tpu.pipeline_mode<synchronous>, transform_indices = @transform_3, window_bounds = array<i64: 128, 128>}, {pipeline_mode = #tpu.pipeline_mode<synchronous>, transform_indices = @transform_4, window_bounds = array<i64: 1, 128>}, {pipeline_mode = #tpu.pipeline_mode<synchronous>, transform_indices = @transform_5, window_bounds = array<i64: 1, 128>}, {transform_indices = @transform_6, window_bounds = array<i64: 8, 128>}]} {
    %c0 = arith.constant 0 : index
    %c0_0 = arith.constant 0 : index
    %0 = vector.load %arg3[%c0, %c0_0] : memref<128x128xf32, #tpu.memory_space<vmem>>, vector<128x128xf32>
    %c0_1 = arith.constant 0 : index
    %c0_2 = arith.constant 0 : index
    %1 = vector.load %arg1[%c0_1, %c0_2] : memref<8x8xf32, #tpu.memory_space<vmem>>, vector<8x8xf32>
    %2 = vector.shape_cast %1 : vector<8x8xf32> to vector<8x8x1xf32>
    %c0_3 = arith.constant 0 : index
    %c0_4 = arith.constant 0 : index
    %3 = vector.load %arg2[%c0_3, %c0_4] : memref<1x128xf32, #tpu.memory_space<vmem>>, vector<1x128xf32>
    %4 = vector.shape_cast %3 : vector<1x128xf32> to vector<1x1x128xf32>
    %5 = vector.broadcast %2 : vector<8x8x1xf32> to vector<8x8x128xf32>
    %6 = vector.broadcast %4 : vector<1x1x128xf32> to vector<8x8x128xf32>
    %7 = arith.mulf %5, %6 : vector<8x8x128xf32>
    %c0_5 = arith.constant 0 : index
    %c0_6 = arith.constant 0 : index
    %8 = vector.load %arg5[%c0_5, %c0_6] : memref<1x128xf32, #tpu.memory_space<vmem>>, vector<1x128xf32>
    %9 = vector.shape_cast %8 : vector<1x128xf32> to vector<1x1x128xf32>
    %10 = vector.broadcast %9 : vector<1x1x128xf32> to vector<8x8x128xf32>
    %11 = arith.addf %7, %10 : vector<8x8x128xf32>
    %12 = vector.extract_strided_slice %11 {offsets = [0, 0, 0], sizes = [1, 8, 128], strides = [1, 1, 1]} : vector<8x8x128xf32> to vector<1x8x128xf32>
    %13 = vector.shape_cast %12 : vector<1x8x128xf32> to vector<8x128xf32>
    %14 = math.tanh %13 : vector<8x128xf32>
    %cst = arith.constant dense<0.000000e+00> : vector<8x128xf32>
    %15 = tpu.matmul %14, %0, %cst {dimension_numbers = #tpu.dot_dimension_numbers<[1], [0], [0], [1], [0, 0, 1, 1], [], []>} : vector<8x128xf32>, vector<128x128xf32>, vector<8x128xf32> -> vector<8x128xf32>
    %16 = vector.extract_strided_slice %11 {offsets = [1, 0, 0], sizes = [1, 8, 128], strides = [1, 1, 1]} : vector<8x8x128xf32> to vector<1x8x128xf32>
    %17 = vector.shape_cast %16 : vector<1x8x128xf32> to vector<8x128xf32>
    %18 = arith.addf %17, %15 : vector<8x128xf32>
    %19 = math.tanh %18 : vector<8x128xf32>
    %cst_7 = arith.constant dense<0.000000e+00> : vector<8x128xf32>
    %20 = tpu.matmul %19, %0, %cst_7 {dimension_numbers = #tpu.dot_dimension_numbers<[1], [0], [0], [1], [0, 0, 1, 1], [], []>} : vector<8x128xf32>, vector<128x128xf32>, vector<8x128xf32> -> vector<8x128xf32>
    %21 = vector.extract_strided_slice %11 {offsets = [2, 0, 0], sizes = [1, 8, 128], strides = [1, 1, 1]} : vector<8x8x128xf32> to vector<1x8x128xf32>
    %22 = vector.shape_cast %21 : vector<1x8x128xf32> to vector<8x128xf32>
    %23 = arith.addf %22, %20 : vector<8x128xf32>
    %24 = math.tanh %23 : vector<8x128xf32>
    %cst_8 = arith.constant dense<0.000000e+00> : vector<8x128xf32>
    %25 = tpu.matmul %24, %0, %cst_8 {dimension_numbers = #tpu.dot_dimension_numbers<[1], [0], [0], [1], [0, 0, 1, 1], [], []>} : vector<8x128xf32>, vector<128x128xf32>, vector<8x128xf32> -> vector<8x128xf32>
    %26 = vector.extract_strided_slice %11 {offsets = [3, 0, 0], sizes = [1, 8, 128], strides = [1, 1, 1]} : vector<8x8x128xf32> to vector<1x8x128xf32>
    %27 = vector.shape_cast %26 : vector<1x8x128xf32> to vector<8x128xf32>
    %28 = arith.addf %27, %25 : vector<8x128xf32>
    %29 = math.tanh %28 : vector<8x128xf32>
    %cst_9 = arith.constant dense<0.000000e+00> : vector<8x128xf32>
    %30 = tpu.matmul %29, %0, %cst_9 {dimension_numbers = #tpu.dot_dimension_numbers<[1], [0], [0], [1], [0, 0, 1, 1], [], []>} : vector<8x128xf32>, vector<128x128xf32>, vector<8x128xf32> -> vector<8x128xf32>
    %31 = vector.extract_strided_slice %11 {offsets = [4, 0, 0], sizes = [1, 8, 128], strides = [1, 1, 1]} : vector<8x8x128xf32> to vector<1x8x128xf32>
    %32 = vector.shape_cast %31 : vector<1x8x128xf32> to vector<8x128xf32>
    %33 = arith.addf %32, %30 : vector<8x128xf32>
    %34 = math.tanh %33 : vector<8x128xf32>
    %cst_10 = arith.constant dense<0.000000e+00> : vector<8x128xf32>
    %35 = tpu.matmul %34, %0, %cst_10 {dimension_numbers = #tpu.dot_dimension_numbers<[1], [0], [0], [1], [0, 0, 1, 1], [], []>} : vector<8x128xf32>, vector<128x128xf32>, vector<8x128xf32> -> vector<8x128xf32>
    %36 = vector.extract_strided_slice %11 {offsets = [5, 0, 0], sizes = [1, 8, 128], strides = [1, 1, 1]} : vector<8x8x128xf32> to vector<1x8x128xf32>
    %37 = vector.shape_cast %36 : vector<1x8x128xf32> to vector<8x128xf32>
    %38 = arith.addf %37, %35 : vector<8x128xf32>
    %39 = math.tanh %38 : vector<8x128xf32>
    %cst_11 = arith.constant dense<0.000000e+00> : vector<8x128xf32>
    %40 = tpu.matmul %39, %0, %cst_11 {dimension_numbers = #tpu.dot_dimension_numbers<[1], [0], [0], [1], [0, 0, 1, 1], [], []>} : vector<8x128xf32>, vector<128x128xf32>, vector<8x128xf32> -> vector<8x128xf32>
    %41 = vector.extract_strided_slice %11 {offsets = [6, 0, 0], sizes = [1, 8, 128], strides = [1, 1, 1]} : vector<8x8x128xf32> to vector<1x8x128xf32>
    %42 = vector.shape_cast %41 : vector<1x8x128xf32> to vector<8x128xf32>
    %43 = arith.addf %42, %40 : vector<8x128xf32>
    %44 = math.tanh %43 : vector<8x128xf32>
    %cst_12 = arith.constant dense<0.000000e+00> : vector<8x128xf32>
    %45 = tpu.matmul %44, %0, %cst_12 {dimension_numbers = #tpu.dot_dimension_numbers<[1], [0], [0], [1], [0, 0, 1, 1], [], []>} : vector<8x128xf32>, vector<128x128xf32>, vector<8x128xf32> -> vector<8x128xf32>
    %46 = vector.extract_strided_slice %11 {offsets = [7, 0, 0], sizes = [1, 8, 128], strides = [1, 1, 1]} : vector<8x8x128xf32> to vector<1x8x128xf32>
    %47 = vector.shape_cast %46 : vector<1x8x128xf32> to vector<8x128xf32>
    %48 = arith.addf %47, %45 : vector<8x128xf32>
    %49 = math.tanh %48 : vector<8x128xf32>
    %c0_13 = arith.constant 0 : index
    %c0_14 = arith.constant 0 : index
    %50 = vector.load %arg4[%c0_13, %c0_14] : memref<128x128xf32, #tpu.memory_space<vmem>>, vector<128x128xf32>
    %cst_15 = arith.constant dense<0.000000e+00> : vector<8x128xf32>
    %51 = tpu.matmul %49, %50, %cst_15 {dimension_numbers = #tpu.dot_dimension_numbers<[1], [0], [0], [1], [0, 0, 1, 1], [], []>} : vector<8x128xf32>, vector<128x128xf32>, vector<8x128xf32> -> vector<8x128xf32>
    %c0_16 = arith.constant 0 : index
    %c0_17 = arith.constant 0 : index
    %52 = vector.load %arg6[%c0_16, %c0_17] : memref<1x128xf32, #tpu.memory_space<vmem>>, vector<1x128xf32>
    %53 = vector.broadcast %52 : vector<1x128xf32> to vector<8x128xf32>
    %54 = arith.addf %51, %53 : vector<8x128xf32>
    %c0_18 = arith.constant 0 : index
    %c0_19 = arith.constant 0 : index
    %55 = vector.load %arg7[%c0_18, %c0_19] : memref<8x128xf32, #tpu.memory_space<vmem>>, vector<8x128xf32>
    tpu.vector_store %arg7[%c0_18, %c0_19], %54 {strides = array<i32>} : memref<8x128xf32, #tpu.memory_space<vmem>>, vector<8x128xf32>,
    return
  }
  func.func @transform_0(%arg0: i32) -> (i32, i32) {
    %c0_i32 = arith.constant 0 : i32
    %c0_i32_0 = arith.constant 0 : i32
    return %c0_i32, %arg0 : i32, i32
  }
  func.func @transform_1(%arg0: i32) -> (i32, i32) {
    %c0_i32 = arith.constant 0 : i32
    %c0_i32_0 = arith.constant 0 : i32
    %c0_i32_1 = arith.constant 0 : i32
    return %c0_i32, %c0_i32_0 : i32, i32
  }
  func.func @transform_2(%arg0: i32) -> (i32, i32) {
    %c0_i32 = arith.constant 0 : i32
    %c0_i32_0 = arith.constant 0 : i32
    %c0_i32_1 = arith.constant 0 : i32
    return %c0_i32, %c0_i32_0 : i32, i32
  }
  func.func @transform_3(%arg0: i32) -> (i32, i32) {
    %c0_i32 = arith.constant 0 : i32
    %c0_i32_0 = arith.constant 0 : i32
    %c0_i32_1 = arith.constant 0 : i32
    return %c0_i32, %c0_i32_0 : i32, i32
  }
  func.func @transform_4(%arg0: i32) -> (i32, i32) {
    %c0_i32 = arith.constant 0 : i32
    %c0_i32_0 = arith.constant 0 : i32
    %c0_i32_1 = arith.constant 0 : i32
    return %c0_i32, %c0_i32_0 : i32, i32
  }
  func.func @transform_5(%arg0: i32) -> (i32, i32) {
    %c0_i32 = arith.constant 0 : i32
    %c0_i32_0 = arith.constant 0 : i32
    %c0_i32_1 = arith.constant 0 : i32
    return %c0_i32, %c0_i32_0 : i32, i32
  }
  func.func @transform_6(%arg0: i32) -> (i32, i32) {
    %c0_i32 = arith.constant 0 : i32
    %c0_i32_0 = arith.constant 0 : i32
    return %arg0, %c0_i32 : i32, i32
  }
}

</mosaic_0001>

<llo_original>
// kernel: tpu_custom_call.1
$region0: #{tpu_custom_call.1}
  #allocation0 [shape = 'u32[]', space=smem, size = 0x4, offset = 0x4, fixed_abs, tag = 'smem constant byte address 0x4 - core index']
  #allocation1 [shape = 'u32[144,128]{1,0:T(1,128)}', space=vmem, size = 0x12000, scoped, tag = 'internal scratch']
  %s0 = inlined_call_operand.hbm [shape: f32[8,8], index: 0, kind: input, shape index: {}]
  %s1 = inlined_call_operand.vmem [shape: f32[1,128], index: 1, kind: input, shape index: {}]
  %s2 = inlined_call_operand.hbm [shape: f32[128,128], index: 2, kind: input, shape index: {}]
  %s3 = inlined_call_operand.hbm [shape: f32[128,128], index: 3, kind: input, shape index: {}]
  %s4 = inlined_call_operand.vmem [shape: f32[1,128], index: 4, kind: input, shape index: {}]
  %s5 = inlined_call_operand.vmem [shape: f32[1,128], index: 5, kind: input, shape index: {}]
  %s6 = inlined_call_operand.hbm [shape: f32[8,128], index: 6, kind: output, shape index: {}]
  %s7 = sld [smem:[#allocation0]]
  $region46: #{tpu_custom_call.1} parent=0
    _
  %s9 = ssub.s32 1, %s7
  %s10 = scalar_select 0, %s9, %s7
  $region1: #{tpu_custom_call.1} parent=0
    #allocation2 [shape = 'u8[4096]{0}', space=vmem, size = 0x1000, scoped, tag = 'input window, operand 0, single buffered']
    #allocation3 [shape = 's32[1]{0}', space=sflag, size = 0x4, scoped, tag = 'scoped memory for tpu_custom_call.1']
    #allocation4 [shape = 's32[1]{0}', space=sflag, size = 0x4, scoped, tag = 'scoped memory for tpu_custom_call.1']
    #allocation5 [shape = 'u8[65536]{0}', space=vmem, size = 0x10000, scoped, tag = 'input window, operand 2, single buffered']
    #allocation6 [shape = 's32[1]{0}', space=sflag, size = 0x4, scoped, tag = 'scoped memory for tpu_custom_call.1']
    #allocation7 [shape = 'u8[65536]{0}', space=vmem, size = 0x10000, scoped, tag = 'input window, operand 3, single buffered']
    #allocation8 [shape = 'u8[4096]{0}', space=vmem, size = 0x1000, scoped, tag = 'output window, operand 0, single buffered']
    %11 = vsyncpa [#allocation3], 0
    %12 = vsyncpa [#allocation6], 0
    %13 = vsyncpa [#allocation4], 0
    // Predicated region
    $region2: #{tpu_custom_call.1} parent=1 // pred_check
      _
    $region3: #{tpu_custom_call.1} parent=1 // pred_check_branch
      %15 = sbr.rel (0) target = $region5
    $region4: #{tpu_custom_call.1} parent=1 // pred_region
      %s17 = ssub.s32 128, 128
      %18 = vsyncadd [#allocation3], %s17
      %s20 = sshll.u32 [#allocation2], 4
      %s21 = int_to_ptr.vmem [resolvable:$true] %s20
      %23 = dma.hbm_to_vmem [thread:$0]  %s0, 128, %s21, [#allocation3]
    $region5: #{tpu_custom_call.1} parent=1 // pred_fallthru
      _
    // Predicated region
    $region6: #{tpu_custom_call.1} parent=1 // pred_check
      _
    $region7: #{tpu_custom_call.1} parent=1 // pred_check_branch
      %25 = sbr.rel (0) target = $region9
    $region8: #{tpu_custom_call.1} parent=1 // pred_region
      _
    $region9: #{tpu_custom_call.1} parent=1 // pred_fallthru
      _
    // Predicated region
    $region10: #{tpu_custom_call.1} parent=1 // pred_check
      _
    $region11: #{tpu_custom_call.1} parent=1 // pred_check_branch
      %27 = sbr.rel (0) target = $region13
    $region12: #{tpu_custom_call.1} parent=1 // pred_region
      %s29 = ssub.s32 2048, 2048
      %30 = vsyncadd [#allocation6], %s29
      %s31 = sshll.u32 [#allocation5], 4
      %s32 = int_to_ptr.vmem [resolvable:$true] %s31
      %37 = dma.hbm_to_vmem [thread:$0]  %s2, 2048, %s32, [#allocation6], 128, 128, 8
    $region13: #{tpu_custom_call.1} parent=1 // pred_fallthru
      _
    // Predicated region
    $region14: #{tpu_custom_call.1} parent=1 // pred_check
      _
    $region15: #{tpu_custom_call.1} parent=1 // pred_check_branch
      %39 = sbr.rel (0) target = $region17
    $region16: #{tpu_custom_call.1} parent=1 // pred_region
      %s41 = ssub.s32 2048, 2048
      %42 = vsyncadd [#allocation6], %s41
      %s43 = sshll.u32 [#allocation7], 4
      %s44 = int_to_ptr.vmem [resolvable:$true] %s43
      %49 = dma.hbm_to_vmem [thread:$0]  %s3, 2048, %s44, [#allocation6], 128, 128, 8
    $region17: #{tpu_custom_call.1} parent=1 // pred_fallthru
      _
    // Predicated region
    $region18: #{tpu_custom_call.1} parent=1 // pred_check
      _
    $region19: #{tpu_custom_call.1} parent=1 // pred_check_branch
      %51 = sbr.rel (0) target = $region21
    $region20: #{tpu_custom_call.1} parent=1 // pred_region
      _
    $region21: #{tpu_custom_call.1} parent=1 // pred_fallthru
      _
    // Predicated region
    $region22: #{tpu_custom_call.1} parent=1 // pred_check
      _
    $region23: #{tpu_custom_call.1} parent=1 // pred_check_branch
      %53 = sbr.rel (0) target = $region25
    $region24: #{tpu_custom_call.1} parent=1 // pred_region
      _
    $region25: #{tpu_custom_call.1} parent=1 // pred_fallthru
      _
    // Predicated region
    $region26: #{tpu_custom_call.1} parent=1 // pred_check
      _
    $region27: #{tpu_custom_call.1} parent=1 // pred_check_branch
      %55 = sbr.rel (0) target = $region29
    $region28: #{tpu_custom_call.1} parent=1 // pred_region
      %56 = dma.done [#allocation3], 128
    $region29: #{tpu_custom_call.1} parent=1 // pred_fallthru
      _
    // Predicated region
    $region30: #{tpu_custom_call.1} parent=1 // pred_check
      _
    $region31: #{tpu_custom_call.1} parent=1 // pred_check_branch
      %58 = sbr.rel (0) target = $region33
    $region32: #{tpu_custom_call.1} parent=1 // pred_region
      %59 = dma.done [#allocation6], 2048
    $region33: #{tpu_custom_call.1} parent=1 // pred_fallthru
      _
    // Predicated region
    $region34: #{tpu_custom_call.1} parent=1 // pred_check
      _
    $region35: #{tpu_custom_call.1} parent=1 // pred_check_branch
      %61 = sbr.rel (0) target = $region37
    $region36: #{tpu_custom_call.1} parent=1 // pred_region
      %62 = dma.done [#allocation6], 2048
    $region37: #{tpu_custom_call.1} parent=1 // pred_fallthru
      _
    %v63 = vld [vmem:[#allocation5] sm:$0xff]
    %v64 = vld [vmem:[#allocation5 + $0x8] sm:$0xff]
    %v65 = vld [vmem:[#allocation5 + $0x10] sm:$0xff]
    %v66 = vld [vmem:[#allocation5 + $0x18] sm:$0xff]
    %v67 = vld [vmem:[#allocation5 + $0x20] sm:$0xff]
    %v68 = vld [vmem:[#allocation5 + $0x28] sm:$0xff]
    %v69 = vld [vmem:[#allocation5 + $0x30] sm:$0xff]
    %v70 = vld [vmem:[#allocation5 + $0x38] sm:$0xff]
    %v71 = vld [vmem:[#allocation5 + $0x40] sm:$0xff]
    %v72 = vld [vmem:[#allocation5 + $0x48] sm:$0xff]
    %v73 = vld [vmem:[#allocation5 + $0x50] sm:$0xff]
    %v74 = vld [vmem:[#allocation5 + $0x58] sm:$0xff]
    %v75 = vld [vmem:[#allocation5 + $0x60] sm:$0xff]
    %v76 = vld [vmem:[#allocation5 + $0x68] sm:$0xff]
    %v77 = vld [vmem:[#allocation5 + $0x70] sm:$0xff]
    %v78 = vld [vmem:[#allocation5 + $0x78] sm:$0xff]
    %v79 = vld [vmem:[#allocation2] sm:$0xff]
    %v80 = vlaneseq
    %v81 = vshrl.u32 %v80, 7
    %v82 = vsub.s32 0, %v81
    %v83 = vrot.slane %v79, %v82
    %85 = vbcast.lane.b32.xlu0 %v83, 256
    %v86 = vpop.permute.xlu0 %85
    %v87 = vlaneseq
    %v88 = vshrl.u32 %v87, 7
    %v89 = vsub.s32 1, %v88
    %v90 = vrot.slane %v79, %v89
    %92 = vbcast.lane.b32.xlu0 %v90, 256
    %v93 = vpop.permute.xlu0 %92
    %v94 = vlaneseq
    %v95 = vshrl.u32 %v94, 7
    %v96 = vsub.s32 2, %v95
    %v97 = vrot.slane %v79, %v96
    %99 = vbcast.lane.b32.xlu0 %v97, 256
    %v100 = vpop.permute.xlu0 %99
    %v101 = vlaneseq
    %v102 = vshrl.u32 %v101, 7
    %v103 = vsub.s32 3, %v102
    %v104 = vrot.slane %v79, %v103
    %106 = vbcast.lane.b32.xlu0 %v104, 256
    %v107 = vpop.permute.xlu0 %106
    %v108 = vlaneseq
    %v109 = vshrl.u32 %v108, 7
    %v110 = vsub.s32 4, %v109
    %v111 = vrot.slane %v79, %v110
    %113 = vbcast.lane.b32.xlu0 %v111, 256
    %v114 = vpop.permute.xlu0 %113
    %v115 = vlaneseq
    %v116 = vshrl.u32 %v115, 7
    %v117 = vsub.s32 5, %v116
    %v118 = vrot.slane %v79, %v117
    %120 = vbcast.lane.b32.xlu0 %v118, 256
    %v121 = vpop.permute.xlu0 %120
    %v122 = vlaneseq
    %v123 = vshrl.u32 %v122, 7
    %v124 = vsub.s32 6, %v123
    %v125 = vrot.slane %v79, %v124
    %127 = vbcast.lane.b32.xlu0 %v125, 256
    %v128 = vpop.permute.xlu0 %127
    %v129 = vlaneseq
    %v130 = vshrl.u32 %v129, 7
    %v131 = vsub.s32 7, %v130
    %v132 = vrot.slane %v79, %v131
    %134 = vbcast.lane.b32.xlu0 %v132, 256
    %v135 = vpop.permute.xlu0 %134
    %v136 = vld [vmem:[%s1] sm:$0x1]
    %v138 = vlaneseq
    %v139 = vshrl.u32 %v138, 7
    %v140 = vsub.s32 0, %v139
    %v141 = vrot.slane %v136, %v140
    %v143 = vmul.f32 %v86, %v141
    %v144 = vmul.f32 %v93, %v141
    %v145 = vmul.f32 %v100, %v141
    %v146 = vmul.f32 %v107, %v141
    %v147 = vmul.f32 %v114, %v141
    %v148 = vmul.f32 %v121, %v141
    %v149 = vmul.f32 %v128, %v141
    %v150 = vmul.f32 %v135, %v141
    %v151 = vld [vmem:[%s4] sm:$0x1]
    %v153 = vlaneseq
    %v154 = vshrl.u32 %v153, 7
    %v155 = vsub.s32 0, %v154
    %v156 = vrot.slane %v151, %v155
    %v158 = vadd.f32 %v143, %v156
    %v159 = vadd.f32 %v144, %v156
    %v160 = vadd.f32 %v145, %v156
    %v161 = vadd.f32 %v146, %v156
    %v162 = vadd.f32 %v147, %v156
    %v163 = vadd.f32 %v148, %v156
    %v164 = vadd.f32 %v149, %v156
    %v165 = vadd.f32 %v150, %v156
    %v166 = vtanh.pop %v158
    %167 = vmatprep.subr.mxu0 0.0
    %168 = vmatpush1.msra.mxu0 %v78
    %169 = vmatprep.subr.mxu0 0.0
    %170 = vmatpush1.msra.mxu0 %v77
    %171 = vmatprep.subr.mxu0 0.0
    %172 = vmatpush1.msra.mxu0 %v76
    %173 = vmatprep.subr.mxu0 0.0
    %174 = vmatpush1.msra.mxu0 %v75
    %175 = vmatprep.subr.mxu0 0.0
    %176 = vmatpush1.msra.mxu0 %v74
    %177 = vmatprep.subr.mxu0 0.0
    %178 = vmatpush1.msra.mxu0 %v73
    %179 = vmatprep.subr.mxu0 0.0
    %180 = vmatpush1.msra.mxu0 %v72
    %181 = vmatprep.subr.mxu0 0.0
    %182 = vmatpush1.msra.mxu0 %v71
    %183 = vmatprep.subr.mxu0 0.0
    %184 = vmatpush1.msra.mxu0 %v70
    %185 = vmatprep.subr.mxu0 0.0
    %186 = vmatpush1.msra.mxu0 %v69
    %187 = vmatprep.subr.mxu0 0.0
    %188 = vmatpush1.msra.mxu0 %v68
    %189 = vmatprep.subr.mxu0 0.0
    %190 = vmatpush1.msra.mxu0 %v67
    %191 = vmatprep.subr.mxu0 0.0
    %192 = vmatpush1.msra.mxu0 %v66
    %193 = vmatprep.subr.mxu0 0.0
    %194 = vmatpush1.msra.mxu0 %v65
    %195 = vmatprep.subr.mxu0 0.0
    %196 = vmatpush1.msra.mxu0 %v64
    %197 = vmatprep.subr.mxu0 0.0
    %198 = vmatpush1.msra.mxu0 %v63
    %199 = vmatprep.subr.mxu0 0.0
    %200 = vmatpush2.msra.mxu0 0.0
    %201 = vmatprep.subr.mxu0 0.0
    %202 = vmatpush2.msra.mxu0 0.0
    %203 = vmatprep.subr.mxu0 0.0
    %204 = vmatpush2.msra.mxu0 0.0
    %205 = vmatprep.subr.mxu0 0.0
    %206 = vmatpush2.msra.mxu0 0.0
    %207 = vmatprep.subr.mxu0 0.0
    %208 = vmatpush2.msra.mxu0 0.0
    %209 = vmatprep.subr.mxu0 0.0
    %210 = vmatpush2.msra.mxu0 0.0
    %211 = vmatprep.subr.mxu0 0.0
    %212 = vmatpush2.msra.mxu0 0.0
    %213 = vmatprep.subr.mxu0 0.0
    %214 = vmatpush2.msra.mxu0 0.0
    %215 = vmatprep.subr.mxu0 0.0
    %216 = vmatpush2.msra.mxu0 0.0
    %217 = vmatprep.subr.mxu0 0.0
    %218 = vmatpush2.msra.mxu0 0.0
    %219 = vmatprep.subr.mxu0 0.0
    %220 = vmatpush2.msra.mxu0 0.0
    %221 = vmatprep.subr.mxu0 0.0
    %222 = vmatpush2.msra.mxu0 0.0
    %223 = vmatprep.subr.mxu0 0.0
    %224 = vmatpush2.msra.mxu0 0.0
    %225 = vmatprep.subr.mxu0 0.0
    %226 = vmatpush2.msra.mxu0 0.0
    %227 = vmatprep.subr.mxu0 0.0
    %228 = vmatpush2.msra.mxu0 0.0
    %229 = vmatprep.subr.mxu0 0.0
    %230 = vmatpush2.msra.mxu0 0.0
    %231 = vmatprep.mubr.f32.mxu0 0.0
    %232 = vmatmul.mubr.f32.gmra.mxu0 %v166
    %v233 = vpop.f32.mrf.mxu0
    %v234 = vadd.f32 0.0, %v233
    %v235 = vpop.f32.mrf.mxu0
    %236 = vdwg.mxu0
    %v237 = vadd.f32 %v159, %v234
    %v238 = vtanh.pop %v237
    %239 = vmatprep.subr.mxu0 0.0
    %240 = vmatpush1.msra.mxu0 %v78
    %241 = vmatprep.subr.mxu0 0.0
    %242 = vmatpush1.msra.mxu0 %v77
    %243 = vmatprep.subr.mxu0 0.0
    %244 = vmatpush1.msra.mxu0 %v76
    %245 = vmatprep.subr.mxu0 0.0
    %246 = vmatpush1.msra.mxu0 %v75
    %247 = vmatprep.subr.mxu0 0.0
    %248 = vmatpush1.msra.mxu0 %v74
    %249 = vmatprep.subr.mxu0 0.0
    %250 = vmatpush1.msra.mxu0 %v73
    %251 = vmatprep.subr.mxu0 0.0
    %252 = vmatpush1.msra.mxu0 %v72
    %253 = vmatprep.subr.mxu0 0.0
    %254 = vmatpush1.msra.mxu0 %v71
    %255 = vmatprep.subr.mxu0 0.0
    %256 = vmatpush1.msra.mxu0 %v70
    %257 = vmatprep.subr.mxu0 0.0
    %258 = vmatpush1.msra.mxu0 %v69
    %259 = vmatprep.subr.mxu0 0.0
    %260 = vmatpush1.msra.mxu0 %v68
    %261 = vmatprep.subr.mxu0 0.0
    %262 = vmatpush1.msra.mxu0 %v67
    %263 = vmatprep.subr.mxu0 0.0
    %264 = vmatpush1.msra.mxu0 %v66
    %265 = vmatprep.subr.mxu0 0.0
    %266 = vmatpush1.msra.mxu0 %v65
    %267 = vmatprep.subr.mxu0 0.0
    %268 = vmatpush1.msra.mxu0 %v64
    %269 = vmatprep.subr.mxu0 0.0
    %270 = vmatpush1.msra.mxu0 %v63
    %271 = vmatprep.subr.mxu0 0.0
    %272 = vmatpush2.msra.mxu0 0.0
    %273 = vmatprep.subr.mxu0 0.0
    %274 = vmatpush2.msra.mxu0 0.0
    %275 = vmatprep.subr.mxu0 0.0
    %276 = vmatpush2.msra.mxu0 0.0
    %277 = vmatprep.subr.mxu0 0.0
    %278 = vmatpush2.msra.mxu0 0.0
    %279 = vmatprep.subr.mxu0 0.0
    %280 = vmatpush2.msra.mxu0 0.0
    %281 = vmatprep.subr.mxu0 0.0
    %282 = vmatpush2.msra.mxu0 0.0
    %283 = vmatprep.subr.mxu0 0.0
    %284 = vmatpush2.msra.mxu0 0.0
    %285 = vmatprep.subr.mxu0 0.0
    %286 = vmatpush2.msra.mxu0 0.0
    %287 = vmatprep.subr.mxu0 0.0
    %288 = vmatpush2.msra.mxu0 0.0
    %289 = vmatprep.subr.mxu0 0.0
    %290 = vmatpush2.msra.mxu0 0.0
    %291 = vmatprep.subr.mxu0 0.0
    %292 = vmatpush2.msra.mxu0 0.0
    %293 = vmatprep.subr.mxu0 0.0
    %294 = vmatpush2.msra.mxu0 0.0
    %295 = vmatprep.subr.mxu0 0.0
    %296 = vmatpush2.msra.mxu0 0.0
    %297 = vmatprep.subr.mxu0 0.0
    %298 = vmatpush2.msra.mxu0 0.0
    %299 = vmatprep.subr.mxu0 0.0
    %300 = vmatpush2.msra.mxu0 0.0
    %301 = vmatprep.subr.mxu0 0.0
    %302 = vmatpush2.msra.mxu0 0.0
    %303 = vmatprep.mubr.f32.mxu0 0.0
    %304 = vmatmul.mubr.f32.gmra.mxu0 %v238
    %v305 = vpop.f32.mrf.mxu0
    %v306 = vadd.f32 0.0, %v305
    %v307 = vpop.f32.mrf.mxu0
    %308 = vdwg.mxu0
    %v309 = vadd.f32 %v160, %v306
    %v310 = vtanh.pop %v309
    %311 = vmatprep.subr.mxu0 0.0
    %312 = vmatpush1.msra.mxu0 %v78
    %313 = vmatprep.subr.mxu0 0.0
    %314 = vmatpush1.msra.mxu0 %v77
    %315 = vmatprep.subr.mxu0 0.0
    %316 = vmatpush1.msra.mxu0 %v76
    %317 = vmatprep.subr.mxu0 0.0
    %318 = vmatpush1.msra.mxu0 %v75
    %319 = vmatprep.subr.mxu0 0.0
    %320 = vmatpush1.msra.mxu0 %v74
    %321 = vmatprep.subr.mxu0 0.0
    %322 = vmatpush1.msra.mxu0 %v73
    %323 = vmatprep.subr.mxu0 0.0
    %324 = vmatpush1.msra.mxu0 %v72
    %325 = vmatprep.subr.mxu0 0.0
    %326 = vmatpush1.msra.mxu0 %v71
    %327 = vmatprep.subr.mxu0 0.0
    %328 = vmatpush1.msra.mxu0 %v70
    %329 = vmatprep.subr.mxu0 0.0
    %330 = vmatpush1.msra.mxu0 %v69
    %331 = vmatprep.subr.mxu0 0.0
    %332 = vmatpush1.msra.mxu0 %v68
    %333 = vmatprep.subr.mxu0 0.0
    %334 = vmatpush1.msra.mxu0 %v67
    %335 = vmatprep.subr.mxu0 0.0
    %336 = vmatpush1.msra.mxu0 %v66
    %337 = vmatprep.subr.mxu0 0.0
    %338 = vmatpush1.msra.mxu0 %v65
    %339 = vmatprep.subr.mxu0 0.0
    %340 = vmatpush1.msra.mxu0 %v64
    %341 = vmatprep.subr.mxu0 0.0
    %342 = vmatpush1.msra.mxu0 %v63
    %343 = vmatprep.subr.mxu0 0.0
    %344 = vmatpush2.msra.mxu0 0.0
    %345 = vmatprep.subr.mxu0 0.0
    %346 = vmatpush2.msra.mxu0 0.0
    %347 = vmatprep.subr.mxu0 0.0
    %348 = vmatpush2.msra.mxu0 0.0
    %349 = vmatprep.subr.mxu0 0.0
    %350 = vmatpush2.msra.mxu0 0.0
    %351 = vmatprep.subr.mxu0 0.0
    %352 = vmatpush2.msra.mxu0 0.0
    %353 = vmatprep.subr.mxu0 0.0
    %354 = vmatpush2.msra.mxu0 0.0
    %355 = vmatprep.subr.mxu0 0.0
    %356 = vmatpush2.msra.mxu0 0.0
    %357 = vmatprep.subr.mxu0 0.0
    %358 = vmatpush2.msra.mxu0 0.0
    %359 = vmatprep.subr.mxu0 0.0
    %360 = vmatpush2.msra.mxu0 0.0
    %361 = vmatprep.subr.mxu0 0.0
    %362 = vmatpush2.msra.mxu0 0.0
    %363 = vmatprep.subr.mxu0 0.0
    %364 = vmatpush2.msra.mxu0 0.0
    %365 = vmatprep.subr.mxu0 0.0
    %366 = vmatpush2.msra.mxu0 0.0
    %367 = vmatprep.subr.mxu0 0.0
    %368 = vmatpush2.msra.mxu0 0.0
    %369 = vmatprep.subr.mxu0 0.0
    %370 = vmatpush2.msra.mxu0 0.0
    %371 = vmatprep.subr.mxu0 0.0
    %372 = vmatpush2.msra.mxu0 0.0
    %373 = vmatprep.subr.mxu0 0.0
    %374 = vmatpush2.msra.mxu0 0.0
    %375 = vmatprep.mubr.f32.mxu0 0.0
    %376 = vmatmul.mubr.f32.gmra.mxu0 %v310
    %v377 = vpop.f32.mrf.mxu0
    %v378 = vadd.f32 0.0, %v377
    %v379 = vpop.f32.mrf.mxu0
    %380 = vdwg.mxu0
    %v381 = vadd.f32 %v161, %v378
    %v382 = vtanh.pop %v381
    %383 = vmatprep.subr.mxu0 0.0
    %384 = vmatpush1.msra.mxu0 %v78
    %385 = vmatprep.subr.mxu0 0.0
    %386 = vmatpush1.msra.mxu0 %v77
    %387 = vmatprep.subr.mxu0 0.0
    %388 = vmatpush1.msra.mxu0 %v76
    %389 = vmatprep.subr.mxu0 0.0
    %390 = vmatpush1.msra.mxu0 %v75
    %391 = vmatprep.subr.mxu0 0.0
    %392 = vmatpush1.msra.mxu0 %v74
    %393 = vmatprep.subr.mxu0 0.0
    %394 = vmatpush1.msra.mxu0 %v73
    %395 = vmatprep.subr.mxu0 0.0
    %396 = vmatpush1.msra.mxu0 %v72
    %397 = vmatprep.subr.mxu0 0.0
    %398 = vmatpush1.msra.mxu0 %v71
    %399 = vmatprep.subr.mxu0 0.0
    %400 = vmatpush1.msra.mxu0 %v70
    %401 = vmatprep.subr.mxu0 0.0
    %402 = vmatpush1.msra.mxu0 %v69
    %403 = vmatprep.subr.mxu0 0.0
    %404 = vmatpush1.msra.mxu0 %v68
    %405 = vmatprep.subr.mxu0 0.0
    %406 = vmatpush1.msra.mxu0 %v67
    %407 = vmatprep.subr.mxu0 0.0
    %408 = vmatpush1.msra.mxu0 %v66
    %409 = vmatprep.subr.mxu0 0.0
    %410 = vmatpush1.msra.mxu0 %v65
    %411 = vmatprep.subr.mxu0 0.0
    %412 = vmatpush1.msra.mxu0 %v64
    %413 = vmatprep.subr.mxu0 0.0
    %414 = vmatpush1.msra.mxu0 %v63
    %415 = vmatprep.subr.mxu0 0.0
    %416 = vmatpush2.msra.mxu0 0.0
    %417 = vmatprep.subr.mxu0 0.0
    %418 = vmatpush2.msra.mxu0 0.0
    %419 = vmatprep.subr.mxu0 0.0
    %420 = vmatpush2.msra.mxu0 0.0
    %421 = vmatprep.subr.mxu0 0.0
    %422 = vmatpush2.msra.mxu0 0.0
    %423 = vmatprep.subr.mxu0 0.0
    %424 = vmatpush2.msra.mxu0 0.0
    %425 = vmatprep.subr.mxu0 0.0
    %426 = vmatpush2.msra.mxu0 0.0
    %427 = vmatprep.subr.mxu0 0.0
    %428 = vmatpush2.msra.mxu0 0.0
    %429 = vmatprep.subr.mxu0 0.0
    %430 = vmatpush2.msra.mxu0 0.0
    %431 = vmatprep.subr.mxu0 0.0
    %432 = vmatpush2.msra.mxu0 0.0
    %433 = vmatprep.subr.mxu0 0.0
    %434 = vmatpush2.msra.mxu0 0.0
    %435 = vmatprep.subr.mxu0 0.0
    %436 = vmatpush2.msra.mxu0 0.0
    %437 = vmatprep.subr.mxu0 0.0
    %438 = vmatpush2.msra.mxu0 0.0
    %439 = vmatprep.subr.mxu0 0.0
    %440 = vmatpush2.msra.mxu0 0.0
    %441 = vmatprep.subr.mxu0 0.0
    %442 = vmatpush2.msra.mxu0 0.0
    %443 = vmatprep.subr.mxu0 0.0
    %444 = vmatpush2.msra.mxu0 0.0
    %445 = vmatprep.subr.mxu0 0.0
    %446 = vmatpush2.msra.mxu0 0.0
    %447 = vmatprep.mubr.f32.mxu0 0.0
    %448 = vmatmul.mubr.f32.gmra.mxu0 %v382
    %v449 = vpop.f32.mrf.mxu0
    %v450 = vadd.f32 0.0, %v449
    %v451 = vpop.f32.mrf.mxu0
    %452 = vdwg.mxu0
    %v453 = vadd.f32 %v162, %v450
    %v454 = vtanh.pop %v453
    %455 = vmatprep.subr.mxu0 0.0
    %456 = vmatpush1.msra.mxu0 %v78
    %457 = vmatprep.subr.mxu0 0.0
    %458 = vmatpush1.msra.mxu0 %v77
    %459 = vmatprep.subr.mxu0 0.0
    %460 = vmatpush1.msra.mxu0 %v76
    %461 = vmatprep.subr.mxu0 0.0
    %462 = vmatpush1.msra.mxu0 %v75
    %463 = vmatprep.subr.mxu0 0.0
    %464 = vmatpush1.msra.mxu0 %v74
    %465 = vmatprep.subr.mxu0 0.0
    %466 = vmatpush1.msra.mxu0 %v73
    %467 = vmatprep.subr.mxu0 0.0
    %468 = vmatpush1.msra.mxu0 %v72
    %469 = vmatprep.subr.mxu0 0.0
    %470 = vmatpush1.msra.mxu0 %v71
    %471 = vmatprep.subr.mxu0 0.0
    %472 = vmatpush1.msra.mxu0 %v70
    %473 = vmatprep.subr.mxu0 0.0
    %474 = vmatpush1.msra.mxu0 %v69
    %475 = vmatprep.subr.mxu0 0.0
    %476 = vmatpush1.msra.mxu0 %v68
    %477 = vmatprep.subr.mxu0 0.0
    %478 = vmatpush1.msra.mxu0 %v67
    %479 = vmatprep.subr.mxu0 0.0
    %480 = vmatpush1.msra.mxu0 %v66
    %481 = vmatprep.subr.mxu0 0.0
    %482 = vmatpush1.msra.mxu0 %v65
    %483 = vmatprep.subr.mxu0 0.0
    %484 = vmatpush1.msra.mxu0 %v64
    %485 = vmatprep.subr.mxu0 0.0
    %486 = vmatpush1.msra.mxu0 %v63
    %487 = vmatprep.subr.mxu0 0.0
    %488 = vmatpush2.msra.mxu0 0.0
    %489 = vmatprep.subr.mxu0 0.0
    %490 = vmatpush2.msra.mxu0 0.0
    %491 = vmatprep.subr.mxu0 0.0
    %492 = vmatpush2.msra.mxu0 0.0
    %493 = vmatprep.subr.mxu0 0.0
    %494 = vmatpush2.msra.mxu0 0.0
    %495 = vmatprep.subr.mxu0 0.0
    %496 = vmatpush2.msra.mxu0 0.0
    %497 = vmatprep.subr.mxu0 0.0
    %498 = vmatpush2.msra.mxu0 0.0
    %499 = vmatprep.subr.mxu0 0.0
    %500 = vmatpush2.msra.mxu0 0.0
    %501 = vmatprep.subr.mxu0 0.0
    %502 = vmatpush2.msra.mxu0 0.0
    %503 = vmatprep.subr.mxu0 0.0
    %504 = vmatpush2.msra.mxu0 0.0
    %505 = vmatprep.subr.mxu0 0.0
    %506 = vmatpush2.msra.mxu0 0.0
    %507 = vmatprep.subr.mxu0 0.0
    %508 = vmatpush2.msra.mxu0 0.0
    %509 = vmatprep.subr.mxu0 0.0
    %510 = vmatpush2.msra.mxu0 0.0
    %511 = vmatprep.subr.mxu0 0.0
    %512 = vmatpush2.msra.mxu0 0.0
    %513 = vmatprep.subr.mxu0 0.0
    %514 = vmatpush2.msra.mxu0 0.0
    %515 = vmatprep.subr.mxu0 0.0
    %516 = vmatpush2.msra.mxu0 0.0
    %517 = vmatprep.subr.mxu0 0.0
    %518 = vmatpush2.msra.mxu0 0.0
    %519 = vmatprep.mubr.f32.mxu0 0.0
    %520 = vmatmul.mubr.f32.gmra.mxu0 %v454
    %v521 = vpop.f32.mrf.mxu0
    %v522 = vadd.f32 0.0, %v521
    %v523 = vpop.f32.mrf.mxu0
    %524 = vdwg.mxu0
    %v525 = vadd.f32 %v163, %v522
    %v526 = vtanh.pop %v525
    %527 = vmatprep.subr.mxu0 0.0
    %528 = vmatpush1.msra.mxu0 %v78
    %529 = vmatprep.subr.mxu0 0.0
    %530 = vmatpush1.msra.mxu0 %v77
    %531 = vmatprep.subr.mxu0 0.0
    %532 = vmatpush1.msra.mxu0 %v76
    %533 = vmatprep.subr.mxu0 0.0
    %534 = vmatpush1.msra.mxu0 %v75
    %535 = vmatprep.subr.mxu0 0.0
    %536 = vmatpush1.msra.mxu0 %v74
    %537 = vmatprep.subr.mxu0 0.0
    %538 = vmatpush1.msra.mxu0 %v73
    %539 = vmatprep.subr.mxu0 0.0
    %540 = vmatpush1.msra.mxu0 %v72
    %541 = vmatprep.subr.mxu0 0.0
    %542 = vmatpush1.msra.mxu0 %v71
    %543 = vmatprep.subr.mxu0 0.0
    %544 = vmatpush1.msra.mxu0 %v70
    %545 = vmatprep.subr.mxu0 0.0
    %546 = vmatpush1.msra.mxu0 %v69
    %547 = vmatprep.subr.mxu0 0.0
    %548 = vmatpush1.msra.mxu0 %v68
    %549 = vmatprep.subr.mxu0 0.0
    %550 = vmatpush1.msra.mxu0 %v67
    %551 = vmatprep.subr.mxu0 0.0
    %552 = vmatpush1.msra.mxu0 %v66
    %553 = vmatprep.subr.mxu0 0.0
    %554 = vmatpush1.msra.mxu0 %v65
    %555 = vmatprep.subr.mxu0 0.0
    %556 = vmatpush1.msra.mxu0 %v64
    %557 = vmatprep.subr.mxu0 0.0
    %558 = vmatpush1.msra.mxu0 %v63
    %559 = vmatprep.subr.mxu0 0.0
    %560 = vmatpush2.msra.mxu0 0.0
    %561 = vmatprep.subr.mxu0 0.0
    %562 = vmatpush2.msra.mxu0 0.0
    %563 = vmatprep.subr.mxu0 0.0
    %564 = vmatpush2.msra.mxu0 0.0
    %565 = vmatprep.subr.mxu0 0.0
    %566 = vmatpush2.msra.mxu0 0.0
    %567 = vmatprep.subr.mxu0 0.0
    %568 = vmatpush2.msra.mxu0 0.0
    %569 = vmatprep.subr.mxu0 0.0
    %570 = vmatpush2.msra.mxu0 0.0
    %571 = vmatprep.subr.mxu0 0.0
    %572 = vmatpush2.msra.mxu0 0.0
    %573 = vmatprep.subr.mxu0 0.0
    %574 = vmatpush2.msra.mxu0 0.0
    %575 = vmatprep.subr.mxu0 0.0
    %576 = vmatpush2.msra.mxu0 0.0
    %577 = vmatprep.subr.mxu0 0.0
    %578 = vmatpush2.msra.mxu0 0.0
    %579 = vmatprep.subr.mxu0 0.0
    %580 = vmatpush2.msra.mxu0 0.0
    %581 = vmatprep.subr.mxu0 0.0
    %582 = vmatpush2.msra.mxu0 0.0
    %583 = vmatprep.subr.mxu0 0.0
    %584 = vmatpush2.msra.mxu0 0.0
    %585 = vmatprep.subr.mxu0 0.0
    %586 = vmatpush2.msra.mxu0 0.0
    %587 = vmatprep.subr.mxu0 0.0
    %588 = vmatpush2.msra.mxu0 0.0
    %589 = vmatprep.subr.mxu0 0.0
    %590 = vmatpush2.msra.mxu0 0.0
    %591 = vmatprep.mubr.f32.mxu0 0.0
    %592 = vmatmul.mubr.f32.gmra.mxu0 %v526
    %v593 = vpop.f32.mrf.mxu0
    %v594 = vadd.f32 0.0, %v593
    %v595 = vpop.f32.mrf.mxu0
    %596 = vdwg.mxu0
    %v597 = vadd.f32 %v164, %v594
    %v598 = vtanh.pop %v597
    %599 = vmatprep.subr.mxu0 0.0
    %600 = vmatpush1.msra.mxu0 %v78
    %601 = vmatprep.subr.mxu0 0.0
    %602 = vmatpush1.msra.mxu0 %v77
    %603 = vmatprep.subr.mxu0 0.0
    %604 = vmatpush1.msra.mxu0 %v76
    %605 = vmatprep.subr.mxu0 0.0
    %606 = vmatpush1.msra.mxu0 %v75
    %607 = vmatprep.subr.mxu0 0.0
    %608 = vmatpush1.msra.mxu0 %v74
    %609 = vmatprep.subr.mxu0 0.0
    %610 = vmatpush1.msra.mxu0 %v73
    %611 = vmatprep.subr.mxu0 0.0
    %612 = vmatpush1.msra.mxu0 %v72
    %613 = vmatprep.subr.mxu0 0.0
    %614 = vmatpush1.msra.mxu0 %v71
    %615 = vmatprep.subr.mxu0 0.0
    %616 = vmatpush1.msra.mxu0 %v70
    %617 = vmatprep.subr.mxu0 0.0
    %618 = vmatpush1.msra.mxu0 %v69
    %619 = vmatprep.subr.mxu0 0.0
    %620 = vmatpush1.msra.mxu0 %v68
    %621 = vmatprep.subr.mxu0 0.0
    %622 = vmatpush1.msra.mxu0 %v67
    %623 = vmatprep.subr.mxu0 0.0
    %624 = vmatpush1.msra.mxu0 %v66
    %625 = vmatprep.subr.mxu0 0.0
    %626 = vmatpush1.msra.mxu0 %v65
    %627 = vmatprep.subr.mxu0 0.0
    %628 = vmatpush1.msra.mxu0 %v64
    %629 = vmatprep.subr.mxu0 0.0
    %630 = vmatpush1.msra.mxu0 %v63
    %631 = vmatprep.subr.mxu0 0.0
    %632 = vmatpush2.msra.mxu0 0.0
    %633 = vmatprep.subr.mxu0 0.0
    %634 = vmatpush2.msra.mxu0 0.0
    %635 = vmatprep.subr.mxu0 0.0
    %636 = vmatpush2.msra.mxu0 0.0
    %637 = vmatprep.subr.mxu0 0.0
    %638 = vmatpush2.msra.mxu0 0.0
    %639 = vmatprep.subr.mxu0 0.0
    %640 = vmatpush2.msra.mxu0 0.0
    %641 = vmatprep.subr.mxu0 0.0
    %642 = vmatpush2.msra.mxu0 0.0
    %643 = vmatprep.subr.mxu0 0.0
    %644 = vmatpush2.msra.mxu0 0.0
    %645 = vmatprep.subr.mxu0 0.0
    %646 = vmatpush2.msra.mxu0 0.0
    %647 = vmatprep.subr.mxu0 0.0
    %648 = vmatpush2.msra.mxu0 0.0
    %649 = vmatprep.subr.mxu0 0.0
    %650 = vmatpush2.msra.mxu0 0.0
    %651 = vmatprep.subr.mxu0 0.0
    %652 = vmatpush2.msra.mxu0 0.0
    %653 = vmatprep.subr.mxu0 0.0
    %654 = vmatpush2.msra.mxu0 0.0
    %655 = vmatprep.subr.mxu0 0.0
    %656 = vmatpush2.msra.mxu0 0.0
    %657 = vmatprep.subr.mxu0 0.0
    %658 = vmatpush2.msra.mxu0 0.0
    %659 = vmatprep.subr.mxu0 0.0
    %660 = vmatpush2.msra.mxu0 0.0
    %661 = vmatprep.subr.mxu0 0.0
    %662 = vmatpush2.msra.mxu0 0.0
    %663 = vmatprep.mubr.f32.mxu0 0.0
    %664 = vmatmul.mubr.f32.gmra.mxu0 %v598
    %v665 = vpop.f32.mrf.mxu0
    %v666 = vadd.f32 0.0, %v665
    %v667 = vpop.f32.mrf.mxu0
    %668 = vdwg.mxu0
    %v669 = vadd.f32 %v165, %v666
    %v670 = vtanh.pop %v669
    %v671 = vld [vmem:[#allocation7] sm:$0xff]
    %v672 = vld [vmem:[#allocation7 + $0x8] sm:$0xff]
    %v673 = vld [vmem:[#allocation7 + $0x10] sm:$0xff]
    %v674 = vld [vmem:[#allocation7 + $0x18] sm:$0xff]
    %v675 = vld [vmem:[#allocation7 + $0x20] sm:$0xff]
    %v676 = vld [vmem:[#allocation7 + $0x28] sm:$0xff]
    %v677 = vld [vmem:[#allocation7 + $0x30] sm:$0xff]
    %v678 = vld [vmem:[#allocation7 + $0x38] sm:$0xff]
    %v679 = vld [vmem:[#allocation7 + $0x40] sm:$0xff]
    %v680 = vld [vmem:[#allocation7 + $0x48] sm:$0xff]
    %v681 = vld [vmem:[#allocation7 + $0x50] sm:$0xff]
    %v682 = vld [vmem:[#allocation7 + $0x58] sm:$0xff]
    %v683 = vld [vmem:[#allocation7 + $0x60] sm:$0xff]
    %v684 = vld [vmem:[#allocation7 + $0x68] sm:$0xff]
    %v685 = vld [vmem:[#allocation7 + $0x70] sm:$0xff]
    %v686 = vld [vmem:[#allocation7 + $0x78] sm:$0xff]
    %v687 = vld [vmem:[%s5] sm:$0x1]
    %v689 = vlaneseq
    %v690 = vshrl.u32 %v689, 7
    %v691 = vsub.s32 0, %v690
    %v692 = vrot.slane %v687, %v691
    %694 = vmatprep.subr.mxu0 0.0
    %695 = vmatpush1.msra.mxu0 %v686
    %696 = vmatprep.subr.mxu0 0.0
    %697 = vmatpush1.msra.mxu0 %v685
    %698 = vmatprep.subr.mxu0 0.0
    %699 = vmatpush1.msra.mxu0 %v684
    %700 = vmatprep.subr.mxu0 0.0
    %701 = vmatpush1.msra.mxu0 %v683
    %702 = vmatprep.subr.mxu0 0.0
    %703 = vmatpush1.msra.mxu0 %v682
    %704 = vmatprep.subr.mxu0 0.0
    %705 = vmatpush1.msra.mxu0 %v681
    %706 = vmatprep.subr.mxu0 0.0
    %707 = vmatpush1.msra.mxu0 %v680
    %708 = vmatprep.subr.mxu0 0.0
    %709 = vmatpush1.msra.mxu0 %v679
    %710 = vmatprep.subr.mxu0 0.0
    %711 = vmatpush1.msra.mxu0 %v678
    %712 = vmatprep.subr.mxu0 0.0
    %713 = vmatpush1.msra.mxu0 %v677
    %714 = vmatprep.subr.mxu0 0.0
    %715 = vmatpush1.msra.mxu0 %v676
    %716 = vmatprep.subr.mxu0 0.0
    %717 = vmatpush1.msra.mxu0 %v675
    %718 = vmatprep.subr.mxu0 0.0
    %719 = vmatpush1.msra.mxu0 %v674
    %720 = vmatprep.subr.mxu0 0.0
    %721 = vmatpush1.msra.mxu0 %v673
    %722 = vmatprep.subr.mxu0 0.0
    %723 = vmatpush1.msra.mxu0 %v672
    %724 = vmatprep.subr.mxu0 0.0
    %725 = vmatpush1.msra.mxu0 %v671
    %726 = vmatprep.subr.mxu0 0.0
    %727 = vmatpush2.msra.mxu0 0.0
    %728 = vmatprep.subr.mxu0 0.0
    %729 = vmatpush2.msra.mxu0 0.0
    %730 = vmatprep.subr.mxu0 0.0
    %731 = vmatpush2.msra.mxu0 0.0
    %732 = vmatprep.subr.mxu0 0.0
    %733 = vmatpush2.msra.mxu0 0.0
    %734 = vmatprep.subr.mxu0 0.0
    %735 = vmatpush2.msra.mxu0 0.0
    %736 = vmatprep.subr.mxu0 0.0
    %737 = vmatpush2.msra.mxu0 0.0
    %738 = vmatprep.subr.mxu0 0.0
    %739 = vmatpush2.msra.mxu0 0.0
    %740 = vmatprep.subr.mxu0 0.0
    %741 = vmatpush2.msra.mxu0 0.0
    %742 = vmatprep.subr.mxu0 0.0
    %743 = vmatpush2.msra.mxu0 0.0
    %744 = vmatprep.subr.mxu0 0.0
    %745 = vmatpush2.msra.mxu0 0.0
    %746 = vmatprep.subr.mxu0 0.0
    %747 = vmatpush2.msra.mxu0 0.0
    %748 = vmatprep.subr.mxu0 0.0
    %749 = vmatpush2.msra.mxu0 0.0
    %750 = vmatprep.subr.mxu0 0.0
    %751 = vmatpush2.msra.mxu0 0.0
    %752 = vmatprep.subr.mxu0 0.0
    %753 = vmatpush2.msra.mxu0 0.0
    %754 = vmatprep.subr.mxu0 0.0
    %755 = vmatpush2.msra.mxu0 0.0
    %756 = vmatprep.subr.mxu0 0.0
    %757 = vmatpush2.msra.mxu0 0.0
    %758 = vmatprep.mubr.f32.mxu0 0.0
    %759 = vmatmul.mubr.f32.gmra.mxu0 %v670
    %v760 = vpop.f32.mrf.mxu0
    %v761 = vadd.f32 %v692, %v760
    %v762 = vpop.f32.mrf.mxu0
    %763 = vdwg.mxu0
    %764 = vst [vmem:[#allocation8] sm:$0xff] %v761
    // Predicated region
    $region38: #{tpu_custom_call.1} parent=1 // pred_check
      _
    $region39: #{tpu_custom_call.1} parent=1 // pred_check_branch
      %766 = sbr.rel (0) target = $region41
    $region40: #{tpu_custom_call.1} parent=1 // pred_region
      %s768 = ssub.s32 128, 128
      %769 = vsyncadd [#allocation4], %s768
      %s771 = sshll.u32 [#allocation8], 4
      %s772 = int_to_ptr.vmem [resolvable:$true] %s771
      %774 = dma.vmem_to_hbm [thread:$0]  %s772, 128, %s6, [#allocation4]
    $region41: #{tpu_custom_call.1} parent=1 // pred_fallthru
      _
    // Predicated region
    $region42: #{tpu_custom_call.1} parent=1 // pred_check
      _
    $region43: #{tpu_custom_call.1} parent=1 // pred_check_branch
      %776 = sbr.rel (0) target = $region45
    $region44: #{tpu_custom_call.1} parent=1 // pred_region
      %777 = dma.done [#allocation4], 128
    $region45: #{tpu_custom_call.1} parent=1 // pred_fallthru
      _
    %778 = vsyncpa [#allocation3], 1
    %779 = vsyncpa [#allocation6], 1
    %780 = vsyncpa [#allocation4], 1

</llo_original>
